<compile_context>
chip_gen: v7x
topology: tpu7x:2x2x1
jax: 0.10.0
libtpu: 0.0.40
codegen_flags: <defaults>
</compile_context>

<pallas_src>
import functools

import jax
import jax.numpy as jnp
from jax.experimental import pallas as pl
from jax.experimental.pallas import tpu as pltpu


# ----------------------------------------------------------------------------
# Fused kernel: per-(batch, head) attention head + accumulated output proj.
# grid = (B, num_heads); head axis is the reduction ("arbitrary") axis.
# ----------------------------------------------------------------------------
def fused_mha_kernel(x_ref, wqkv_ref, bqkv_ref, wp_ref, bp_ref,
                     o_ref, acc_ref, *, inv_scaling, hidden_dim):
    h = pl.program_id(1)

    @pl.when(h == 0)
    def _init():
        acc_ref[...] = jnp.zeros_like(acc_ref)

    H = hidden_dim
    x = x_ref[0]                                   # (S, H)

    # Stacked Q/K/V projection: one (S,H) x (H,3H) MXU matmul.
    qkv = jnp.dot(x, wqkv_ref[0],
                  preferred_element_type=jnp.float32) + bqkv_ref[0]  # (S, 3H)

    # Fold the (mis)scaling of the reference into q: scores/scaling == (q/scaling) @ k^T
    q = qkv[:, :H] * inv_scaling                   # (S, H)
    k = qkv[:, H:2 * H]                            # (S, H)
    v = qkv[:, 2 * H:]                             # (S, H)

    scores = jnp.dot(q, k.T, preferred_element_type=jnp.float32)     # (S, S)

    # numerically-stable softmax over the last axis
    m = jnp.max(scores, axis=-1, keepdims=True)
    e = jnp.exp(scores - m)
    p = e * pl.reciprocal(jnp.sum(e, axis=-1, keepdims=True), approx=True)

    head_out = jnp.dot(p, v, preferred_element_type=jnp.float32)     # (S, H)

    # Fused "concat + projection": this head's contribution to the output.
    acc_ref[...] += jnp.dot(head_out, wp_ref[0],
                            preferred_element_type=jnp.float32)      # (S, H)

    @pl.when(h == pl.num_programs(1) - 1)
    def _finalize():
        o_ref[0] = acc_ref[...] + bp_ref[...]


def multi_head_attention(x, params, *, num_heads):
    """x: (B, S, H) float32.  params: dict of stacked per-head weights."""
    B, S, H = x.shape
    head_dim = H // num_heads
    inv_scaling = float(head_dim) ** 0.5   # == 1 / scaling, scaling = head_dim**-0.5

    # Pack per-head Q/K/V weights along the output dim: (nh, H, 3H), (nh, 1, 3H).
    # (One-time layout plumbing outside the kernel; pre-pack in production.)
    wqkv = jnp.concatenate([params["wq"], params["wk"], params["wv"]], axis=-1)
    bqkv = jnp.concatenate([params["bq"], params["bk"], params["bv"]], axis=-1)
    # wp3[h] is head h's (H, H) slice of the (nh*H, H) projection weight.
    wp3 = params["wp"].reshape(num_heads, H, H)
    bp = params["bp"]                              # (1, H)

    kernel = functools.partial(fused_mha_kernel,
                               inv_scaling=inv_scaling, hidden_dim=H)

    out = pl.pallas_call(
        kernel,
        out_shape=jax.ShapeDtypeStruct((B, S, H), jnp.float32),
        grid_spec=pltpu.PrefetchScalarGridSpec(
            num_scalar_prefetch=0,
            grid=(B, num_heads),
            in_specs=[
                # x: block index constant across h -> fetched once per batch row
                pl.BlockSpec((1, S, H), lambda b, h: (b, 0, 0)),
                pl.BlockSpec((1, H, 3 * H), lambda b, h: (h, 0, 0)),  # wqkv
                pl.BlockSpec((1, 1, 3 * H), lambda b, h: (h, 0, 0)),  # bqkv
                pl.BlockSpec((1, H, H), lambda b, h: (h, 0, 0)),      # wp slice
                pl.BlockSpec((1, H), lambda b, h: (0, 0)),            # bp
            ],
            # Output block revisited across the head (reduction) axis.
            out_specs=pl.BlockSpec((1, S, H), lambda b, h: (b, 0, 0)),
            scratch_shapes=[pltpu.VMEM((S, H), jnp.float32)],
        ),
        compiler_params=pltpu.CompilerParams(
            dimension_semantics=("parallel", "arbitrary")),
    )(x, wqkv, bqkv, wp3, bp)

    # dropout is identity in inference
    return out


# ----------------------------------------------------------------------------
# Pure-JAX reference (for self-check)
# ----------------------------------------------------------------------------
def reference(x, params, *, num_heads):
    B, S, H = x.shape
    head_dim = H // num_heads
    scaling = float(head_dim) ** (-0.5)
    outs = []
    for h in range(num_heads):
        q = x @ params["wq"][h] + params["bq"][h]
        k = x @ params["wk"][h] + params["bk"][h]
        v = x @ params["wv"][h] + params["bv"][h]
        s = jnp.einsum("bqd,bkd->bqk", q, k) / scaling
        p = jax.nn.softmax(s, axis=-1)
        outs.append(jnp.einsum("bqk,bkd->bqd", p, v))
    cat = jnp.concatenate(outs, axis=-1)
    return cat @ params["wp"] + params["bp"]


def init_params(key, hidden_dim, num_heads):
    """Deterministic init, mimicking nn.Linear's uniform(-1/sqrt(in), 1/sqrt(in))."""
    H, nh = hidden_dim, num_heads
    ks = jax.random.split(key, 8)
    lim_h = 1.0 / (H ** 0.5)
    lim_p = 1.0 / ((H * nh) ** 0.5)
    u = lambda k, shape, lim: jax.random.uniform(k, shape, jnp.float32, -lim, lim)
    return {
        # stored as (in, out) so kernels do x @ W + b (equivalent to torch x @ W^T + b)
        "wq": u(ks[0], (nh, H, H), lim_h),
        "wk": u(ks[1], (nh, H, H), lim_h),
        "wv": u(ks[2], (nh, H, H), lim_h),
        "bq": u(ks[3], (nh, 1, H), lim_h),
        "bk": u(ks[4], (nh, 1, H), lim_h),
        "bv": u(ks[5], (nh, 1, H), lim_h),
        "wp": u(ks[6], (nh * H, H), lim_p),
        "bp": u(ks[7], (1, H), lim_p),
    }


if __name__ == "__main__":
    B, S, H, NH = 2, 8, 32, 4           # batch, seq, hidden_dim, num_heads
    key = jax.random.PRNGKey(0)
    kx, kp = jax.random.split(key)
    x = jax.random.normal(kx, (B, S, H), dtype=jnp.float32)
    params = init_params(kp, H, NH)

    out = multi_head_attention(x, params, num_heads=NH)
    out = jax.block_until_ready(out)

    ref = reference(x, params, num_heads=NH)
    assert out.shape == (B, S, H)
    # tolerance accounts for the approximate (EUP) reciprocal in the softmax
    assert jnp.allclose(out, ref, atol=2e-3, rtol=2e-3), "mismatch vs reference"

    print("KERNEL_OK")
</pallas_src>

<mosaic_0001>
module attributes {stable_mosaic.version = 11 : i64} {
  func.func @fused_mha_kernel(%arg0: i32, %arg1: i32, %arg2: memref<1x8x32xf32, #tpu.memory_space<vmem>>, %arg3: memref<1x32x96xf32, #tpu.memory_space<vmem>>, %arg4: memref<1x1x96xf32, #tpu.memory_space<vmem>>, %arg5: memref<1x32x32xf32, #tpu.memory_space<vmem>>, %arg6: memref<1x32xf32, #tpu.memory_space<vmem>>, %arg7: memref<1x8x32xf32, #tpu.memory_space<vmem>>, %arg8: memref<8x32xf32, #tpu.memory_space<vmem>>) attributes {dimension_semantics = [#tpu.dimension_semantics<parallel>, #tpu.dimension_semantics<arbitrary>], iteration_bounds = array<i64: 2, 4>, scalar_prefetch = 0 : i64, scratch_operands = 1 : i64, tpu.core_type = #tpu.core_type<tc>, window_params = [{transform_indices = @transform_0, window_bounds = array<i64: 1, 8, 32>}, {transform_indices = @transform_1, window_bounds = array<i64: 1, 32, 96>}, {transform_indices = @transform_2, window_bounds = array<i64: 1, 1, 96>}, {transform_indices = @transform_3, window_bounds = array<i64: 1, 32, 32>}, {pipeline_mode = #tpu.pipeline_mode<synchronous>, transform_indices = @transform_4, window_bounds = array<i64: 1, 32>}, {transform_indices = @transform_5, window_bounds = array<i64: 1, 8, 32>}]} {
    %c0_i32 = arith.constant 0 : i32
    %0 = arith.cmpi eq, %arg1, %c0_i32 : i32
    %1 = arith.extui %0 : i1 to i32
    %c0_i32_0 = arith.constant 0 : i32
    %2 = arith.cmpi ne, %1, %c0_i32_0 : i32
    scf.if %2 {
      %cst_23 = arith.constant 0.000000e+00 : f32
      %39 = vector.broadcast %cst_23 : f32 to vector<8x32xf32>
      %c0_24 = arith.constant 0 : index
      %c0_25 = arith.constant 0 : index
      %40 = vector.load %arg8[%c0_24, %c0_25] : memref<8x32xf32, #tpu.memory_space<vmem>>, vector<8x32xf32>
      tpu.vector_store %arg8[%c0_24, %c0_25], %39 {strides = array<i32>} : memref<8x32xf32, #tpu.memory_space<vmem>>, vector<8x32xf32>,
    } else {
    }
    %c0 = arith.constant 0 : index
    %c0_1 = arith.constant 0 : index
    %c0_2 = arith.constant 0 : index
    %3 = vector.load %arg2[%c0, %c0_1, %c0_2] : memref<1x8x32xf32, #tpu.memory_space<vmem>>, vector<1x8x32xf32>
    %4 = vector.shape_cast %3 : vector<1x8x32xf32> to vector<8x32xf32>
    %c0_3 = arith.constant 0 : index
    %c0_4 = arith.constant 0 : index
    %c0_5 = arith.constant 0 : index
    %5 = vector.load %arg3[%c0_3, %c0_4, %c0_5] : memref<1x32x96xf32, #tpu.memory_space<vmem>>, vector<1x32x96xf32>
    %6 = vector.shape_cast %5 : vector<1x32x96xf32> to vector<32x96xf32>
    %cst = arith.constant dense<0.000000e+00> : vector<8x96xf32>
    %7 = tpu.matmul %4, %6, %cst {dimension_numbers = #tpu.dot_dimension_numbers<[1], [0], [0], [1], [0, 0, 1, 1], [], []>} : vector<8x32xf32>, vector<32x96xf32>, vector<8x96xf32> -> vector<8x96xf32>
    %c0_6 = arith.constant 0 : index
    %c0_7 = arith.constant 0 : index
    %c0_8 = arith.constant 0 : index
    %8 = vector.load %arg4[%c0_6, %c0_7, %c0_8] : memref<1x1x96xf32, #tpu.memory_space<vmem>>, vector<1x1x96xf32>
    %9 = vector.shape_cast %8 : vector<1x1x96xf32> to vector<1x96xf32>
    %10 = vector.broadcast %9 : vector<1x96xf32> to vector<8x96xf32>
    %11 = arith.addf %7, %10 : vector<8x96xf32>
    %12 = vector.extract_strided_slice %11 {offsets = [0, 0], sizes = [8, 32], strides = [1, 1]} : vector<8x96xf32> to vector<8x32xf32>
    %cst_9 = arith.constant 2.82842708 : f32
    %13 = vector.broadcast %cst_9 : f32 to vector<8x32xf32>
    %14 = arith.mulf %12, %13 : vector<8x32xf32>
    %15 = vector.extract_strided_slice %11 {offsets = [0, 32], sizes = [8, 32], strides = [1, 1]} : vector<8x96xf32> to vector<8x32xf32>
    %16 = vector.extract_strided_slice %11 {offsets = [0, 64], sizes = [8, 32], strides = [1, 1]} : vector<8x96xf32> to vector<8x32xf32>
    %17 = tpu.transpose %15, [1, 0] : vector<8x32xf32> -> vector<32x8xf32>
    %cst_10 = arith.constant dense<0.000000e+00> : vector<8x8xf32>
    %18 = tpu.matmul %14, %17, %cst_10 {dimension_numbers = #tpu.dot_dimension_numbers<[1], [0], [0], [1], [0, 0, 1, 1], [], []>} : vector<8x32xf32>, vector<32x8xf32>, vector<8x8xf32> -> vector<8x8xf32>
    %cst_11 = arith.constant dense<0xFF800000> : vector<8xf32>
    %19 = vector.multi_reduction <maximumf>, %18, %cst_11 [1] : vector<8x8xf32> to vector<8xf32>
    %20 = vector.shape_cast %19 : vector<8xf32> to vector<8x1xf32>
    %21 = vector.broadcast %20 : vector<8x1xf32> to vector<8x8xf32>
    %22 = arith.subf %18, %21 : vector<8x8xf32>
    %23 = math.exp %22 : vector<8x8xf32>
    %cst_12 = arith.constant dense<0.000000e+00> : vector<8xf32>
    %24 = vector.multi_reduction <add>, %23, %cst_12 [1] : vector<8x8xf32> to vector<8xf32>
    %25 = vector.shape_cast %24 : vector<8xf32> to vector<8x1xf32>
    %26 = tpu.reciprocal %25 {approx = true} : vector<8x1xf32> -> vector<8x1xf32>
    %27 = vector.broadcast %26 : vector<8x1xf32> to vector<8x8xf32>
    %28 = arith.mulf %23, %27 : vector<8x8xf32>
    %cst_13 = arith.constant dense<0.000000e+00> : vector<8x32xf32>
    %29 = tpu.matmul %28, %16, %cst_13 {dimension_numbers = #tpu.dot_dimension_numbers<[1], [0], [0], [1], [0, 0, 1, 1], [], []>} : vector<8x8xf32>, vector<8x32xf32>, vector<8x32xf32> -> vector<8x32xf32>
    %c0_14 = arith.constant 0 : index
    %c0_15 = arith.constant 0 : index
    %30 = vector.load %arg8[%c0_14, %c0_15] : memref<8x32xf32, #tpu.memory_space<vmem>>, vector<8x32xf32>
    %c0_16 = arith.constant 0 : index
    %c0_17 = arith.constant 0 : index
    %c0_18 = arith.constant 0 : index
    %31 = vector.load %arg5[%c0_16, %c0_17, %c0_18] : memref<1x32x32xf32, #tpu.memory_space<vmem>>, vector<1x32x32xf32>
    %32 = vector.shape_cast %31 : vector<1x32x32xf32> to vector<32x32xf32>
    %cst_19 = arith.constant dense<0.000000e+00> : vector<8x32xf32>
    %33 = tpu.matmul %29, %32, %cst_19 {dimension_numbers = #tpu.dot_dimension_numbers<[1], [0], [0], [1], [0, 0, 1, 1], [], []>} : vector<8x32xf32>, vector<32x32xf32>, vector<8x32xf32> -> vector<8x32xf32>
    %34 = arith.addf %30, %33 : vector<8x32xf32>
    %c0_20 = arith.constant 0 : index
    %c0_21 = arith.constant 0 : index
    %35 = vector.load %arg8[%c0_20, %c0_21] : memref<8x32xf32, #tpu.memory_space<vmem>>, vector<8x32xf32>
    tpu.vector_store %arg8[%c0_20, %c0_21], %34 {strides = array<i32>} : memref<8x32xf32, #tpu.memory_space<vmem>>, vector<8x32xf32>,
    %c3_i32 = arith.constant 3 : i32
    %36 = arith.cmpi eq, %arg1, %c3_i32 : i32
    %37 = arith.extui %36 : i1 to i32
    %c0_i32_22 = arith.constant 0 : i32
    %38 = arith.cmpi ne, %37, %c0_i32_22 : i32
    scf.if %38 {
      %c0_23 = arith.constant 0 : index
      %c0_24 = arith.constant 0 : index
      %39 = vector.load %arg8[%c0_23, %c0_24] : memref<8x32xf32, #tpu.memory_space<vmem>>, vector<8x32xf32>
      %c0_25 = arith.constant 0 : index
      %c0_26 = arith.constant 0 : index
      %40 = vector.load %arg6[%c0_25, %c0_26] : memref<1x32xf32, #tpu.memory_space<vmem>>, vector<1x32xf32>
      %41 = vector.broadcast %40 : vector<1x32xf32> to vector<8x32xf32>
      %42 = arith.addf %39, %41 : vector<8x32xf32>
      %c0_27 = arith.constant 0 : index
      %c0_28 = arith.constant 0 : index
      %c0_29 = arith.constant 0 : index
      %43 = vector.load %arg7[%c0_27, %c0_28, %c0_29] : memref<1x8x32xf32, #tpu.memory_space<vmem>>, vector<1x8x32xf32>
      %44 = vector.shape_cast %43 : vector<1x8x32xf32> to vector<8x32xf32>
      %45 = vector.shape_cast %42 : vector<8x32xf32> to vector<1x8x32xf32>
      tpu.vector_store %arg7[%c0_27, %c0_28, %c0_29], %45 {strides = array<i32>} : memref<1x8x32xf32, #tpu.memory_space<vmem>>, vector<1x8x32xf32>,
    } else {
    }
    return
  }
  func.func @transform_0(%arg0: i32, %arg1: i32) -> (i32, i32, i32) {
    %c0_i32 = arith.constant 0 : i32
    %c0_i32_0 = arith.constant 0 : i32
    %c0_i32_1 = arith.constant 0 : i32
    return %arg0, %c0_i32, %c0_i32_0 : i32, i32, i32
  }
  func.func @transform_1(%arg0: i32, %arg1: i32) -> (i32, i32, i32) {
    %c0_i32 = arith.constant 0 : i32
    %c0_i32_0 = arith.constant 0 : i32
    %c0_i32_1 = arith.constant 0 : i32
    return %arg1, %c0_i32, %c0_i32_0 : i32, i32, i32
  }
  func.func @transform_2(%arg0: i32, %arg1: i32) -> (i32, i32, i32) {
    %c0_i32 = arith.constant 0 : i32
    %c0_i32_0 = arith.constant 0 : i32
    %c0_i32_1 = arith.constant 0 : i32
    return %arg1, %c0_i32, %c0_i32_0 : i32, i32, i32
  }
  func.func @transform_3(%arg0: i32, %arg1: i32) -> (i32, i32, i32) {
    %c0_i32 = arith.constant 0 : i32
    %c0_i32_0 = arith.constant 0 : i32
    %c0_i32_1 = arith.constant 0 : i32
    return %arg1, %c0_i32, %c0_i32_0 : i32, i32, i32
  }
  func.func @transform_4(%arg0: i32, %arg1: i32) -> (i32, i32) {
    %c0_i32 = arith.constant 0 : i32
    %c0_i32_0 = arith.constant 0 : i32
    %c0_i32_1 = arith.constant 0 : i32
    return %c0_i32, %c0_i32_0 : i32, i32
  }
  func.func @transform_5(%arg0: i32, %arg1: i32) -> (i32, i32, i32) {
    %c0_i32 = arith.constant 0 : i32
    %c0_i32_0 = arith.constant 0 : i32
    %c0_i32_1 = arith.constant 0 : i32
    return %arg0, %c0_i32, %c0_i32_0 : i32, i32, i32
  }
}

</mosaic_0001>

<llo_original>
// kernel: tpu_custom_call.1
$region0: #{tpu_custom_call.1}
  #allocation0 [shape = 'u32[]', space=smem, size = 0x4, offset = 0x4, fixed_abs, tag = 'smem constant byte address 0x4 - core index']
  #allocation1 [shape = 'u32[144,128]{1,0:T(1,128)}', space=vmem, size = 0x12000, scoped, tag = 'internal scratch']
  #allocation2 [shape = 'f32[8,32]{1,0:T(8,128)}', space=vmem, size = 0x1000, scoped, tag = 'scratch operand']
  %s0 = inlined_call_operand.hbm [shape: f32[2,8,32], index: 0, kind: input, shape index: {}]
  %s1 = inlined_call_operand.hbm [shape: f32[4,32,96], index: 1, kind: input, shape index: {}]
  %s2 = inlined_call_operand.vmem [shape: f32[4,1,96], index: 2, kind: input, shape index: {}]
  %s3 = inlined_call_operand.hbm [shape: f32[4,32,32], index: 3, kind: input, shape index: {}]
  %s4 = inlined_call_operand.vmem [shape: f32[1,32], index: 4, kind: input, shape index: {}]
  %s5 = inlined_call_operand.hbm [shape: f32[2,8,32], index: 5, kind: output, shape index: {}]
  %s6 = sld [smem:[#allocation0]]
  $region73: #{tpu_custom_call.1} parent=0
    _
  %s8 = ssub.s32 1, %s6
  %s9 = scalar_select 0, %s8, %s6
  $region1: #{tpu_custom_call.1} parent=0
    #allocation3 [shape = 'u8[8192]{0}', space=vmem, size = 0x2000, scoped, tag = 'input window, operand 0']
    #allocation4 [shape = 's32[2]{0}', space=sflag, size = 0x8, scoped, tag = 'scoped memory for tpu_custom_call.1']
    #allocation5 [shape = 's32[2]{0}', space=sflag, size = 0x8, scoped, tag = 'scoped memory for tpu_custom_call.1']
    #allocation6 [shape = 'u8[32768]{0}', space=vmem, size = 0x8000, scoped, tag = 'input window, operand 1']
    #allocation7 [shape = 's32[2]{0}', space=sflag, size = 0x8, scoped, tag = 'scoped memory for tpu_custom_call.1']
    #allocation8 [shape = 'u8[32768]{0}', space=vmem, size = 0x8000, scoped, tag = 'input window, operand 3']
    #allocation9 [shape = 'u8[8192]{0}', space=vmem, size = 0x2000, scoped, tag = 'output window, operand 0']
    %10 = vsyncpa [#allocation4], 0
    %s11 = scalar_lea.sflag [#allocation4], 1
    %12 = vsyncpa %s11, 0
    %13 = vsyncpa [#allocation7], 0
    %s14 = scalar_lea.sflag [#allocation7], 1
    %15 = vsyncpa %s14, 0
    %16 = vsyncpa [#allocation5], 0
    %s17 = scalar_lea.sflag [#allocation5], 1
    %18 = vsyncpa %s17, 0
    loop: start=0, step=1, limit=10
    $region2: #{tpu_custom_call.1} parent=1 // loop_pre_header
      _
    $region3: #{tpu_custom_call.1} parent=1 // loop_header
      %s20 = sphi 0, %s24
      %p21 = scmp.ge.s32.totalorder %s20, 10
      %s27 = sphi 0, %s39
      %s28 = sphi 0, %s35
      %s29 = sphi 0, %s27
      %s30 = sphi 0, %s28
      %s31 = sphi 0, %s29
      %s32 = sphi 0, %s30
      %s42 = sphi 0, %s44
      %s45 = sphi 0, %s42
      %s46 = sphi 0, %s45
      %s62 = sphi 0, %s46
      %s68 = sphi 0, %s70
      %s71 = sphi 0, %s68
      %s72 = sphi 0, %s71
      %s88 = sphi 0, %s72
      %s94 = sphi 0, %s96
      %s97 = sphi 0, %s94
      %s98 = sphi 0, %s97
      %s114 = sphi 0, %s98
      %s120 = sphi 0, %s122
      %s123 = sphi 0, %s120
      %s124 = sphi 0, %s123
      %s140 = sphi 0, %s124
      %s144 = sphi 0, %s144
      %s146 = sphi 0, %s144
      %s147 = sphi 0, %s146
      %s161 = sphi 0, %s147
      %s167 = sphi 0, %s169
      %s170 = sphi 0, %s167
      %s171 = sphi 0, %s170
      %s187 = sphi 0, %s171
    $region4: #{tpu_custom_call.1} parent=1 // loop_header_branch
      %23 = sbr.rel (%p21) target = $region8
    $region5: #{tpu_custom_call.1} parent=1 // loop_body
      %s25 = ssub.s32 %s20, 1
      %s26 = ssub.s32 %s20, 2
      %s33 = sadd.s32 1, %s28
      %p34 = scmp.ge.s32.totalorder %s33, 4
      %s35 = scalar_select %p34, 0, %s33
      %s36 = sadd.s32 1, %s27
      %s37 = scalar_select %p34, %s36, %s27
      %p38 = scmp.ge.s32.totalorder %s37, 2
      %s39 = scalar_select %p38, 0, %s37
      %s40 = ssub.s32 %s27, %s39
      %p41 = scmp.eq.s32.totalorder %s40, 0
      %s43 = sadd.s32 %s42, 1
      %s44 = scalar_select %p41, %s42, %s43
      %p47 = pneg %p41
      %p48 = scmp.eq.s32.totalorder %s20, 7
      %p49 = por %p47, %p48
      %p50 = scmp.ne.s32.totalorder %s42, %s45
      %p51 = scmp.eq.s32.totalorder %s20, 0
      %p52 = por %p50, %p51
      %p53 = scmp.ne.s32.totalorder %s42, %s45
      %p54 = scmp.eq.s32.totalorder %s25, 7
      %p55 = por %p53, %p54
      %p56 = scmp.ne.s32.totalorder %s45, %s46
      %p57 = scmp.eq.s32.totalorder %s25, 0
      %p58 = por %p56, %p57
      %p59 = scmp.ne.s32.totalorder %s45, %s46
      %p60 = scmp.eq.s32.totalorder %s26, 7
      %p61 = por %p59, %p60
      %p63 = scmp.ne.s32.totalorder %s46, %s62
      %p64 = scmp.eq.s32.totalorder %s26, 0
      %p65 = por %p63, %p64
      %s66 = ssub.s32 %s28, %s35
      %p67 = scmp.eq.s32.totalorder %s66, 0
      %s69 = sadd.s32 %s68, 1
      %s70 = scalar_select %p67, %s68, %s69
      %p73 = pneg %p67
      %p74 = scmp.eq.s32.totalorder %s20, 7
      %p75 = por %p73, %p74
      %p76 = scmp.ne.s32.totalorder %s68, %s71
      %p77 = scmp.eq.s32.totalorder %s20, 0
      %p78 = por %p76, %p77
      %p79 = scmp.ne.s32.totalorder %s68, %s71
      %p80 = scmp.eq.s32.totalorder %s25, 7
      %p81 = por %p79, %p80
      %p82 = scmp.ne.s32.totalorder %s71, %s72
      %p83 = scmp.eq.s32.totalorder %s25, 0
      %p84 = por %p82, %p83
      %p85 = scmp.ne.s32.totalorder %s71, %s72
      %p86 = scmp.eq.s32.totalorder %s26, 7
      %p87 = por %p85, %p86
      %p89 = scmp.ne.s32.totalorder %s72, %s88
      %p90 = scmp.eq.s32.totalorder %s26, 0
      %p91 = por %p89, %p90
      %s92 = ssub.s32 %s28, %s35
      %p93 = scmp.eq.s32.totalorder %s92, 0
      %s95 = sadd.s32 %s94, 1
      %s96 = scalar_select %p93, %s94, %s95
      %p99 = pneg %p93
      %p100 = scmp.eq.s32.totalorder %s20, 7
      %p101 = por %p99, %p100
      %p102 = scmp.ne.s32.totalorder %s94, %s97
      %p103 = scmp.eq.s32.totalorder %s20, 0
      %p104 = por %p102, %p103
      %p105 = scmp.ne.s32.totalorder %s94, %s97
      %p106 = scmp.eq.s32.totalorder %s25, 7
      %p107 = por %p105, %p106
      %p108 = scmp.ne.s32.totalorder %s97, %s98
      %p109 = scmp.eq.s32.totalorder %s25, 0
      %p110 = por %p108, %p109
      %p111 = scmp.ne.s32.totalorder %s97, %s98
      %p112 = scmp.eq.s32.totalorder %s26, 7
      %p113 = por %p111, %p112
      %p115 = scmp.ne.s32.totalorder %s98, %s114
      %p116 = scmp.eq.s32.totalorder %s26, 0
      %p117 = por %p115, %p116
      %s118 = ssub.s32 %s28, %s35
      %p119 = scmp.eq.s32.totalorder %s118, 0
      %s121 = sadd.s32 %s120, 1
      %s122 = scalar_select %p119, %s120, %s121
      %p125 = pneg %p119
      %p126 = scmp.eq.s32.totalorder %s20, 7
      %p127 = por %p125, %p126
      %p128 = scmp.ne.s32.totalorder %s120, %s123
      %p129 = scmp.eq.s32.totalorder %s20, 0
      %p130 = por %p128, %p129
      %p131 = scmp.ne.s32.totalorder %s120, %s123
      %p132 = scmp.eq.s32.totalorder %s25, 7
      %p133 = por %p131, %p132
      %p134 = scmp.ne.s32.totalorder %s123, %s124
      %p135 = scmp.eq.s32.totalorder %s25, 0
      %p136 = por %p134, %p135
      %p137 = scmp.ne.s32.totalorder %s123, %s124
      %p138 = scmp.eq.s32.totalorder %s26, 7
      %p139 = por %p137, %p138
      %p141 = scmp.ne.s32.totalorder %s124, %s140
      %p142 = scmp.eq.s32.totalorder %s26, 0
      %p143 = por %p141, %p142
      %s145 = sadd.s32 %s144, 1
      %p148 = scmp.eq.s32.totalorder %s20, 7
      %p149 = scmp.ne.s32.totalorder %s144, %s146
      %p150 = scmp.eq.s32.totalorder %s20, 0
      %p151 = por %p149, %p150
      %p152 = scmp.ne.s32.totalorder %s144, %s146
      %p153 = scmp.eq.s32.totalorder %s25, 7
      %p154 = por %p152, %p153
      %p155 = scmp.ne.s32.totalorder %s146, %s147
      %p156 = scmp.eq.s32.totalorder %s25, 0
      %p157 = por %p155, %p156
      %p158 = scmp.ne.s32.totalorder %s146, %s147
      %p159 = scmp.eq.s32.totalorder %s26, 7
      %p160 = por %p158, %p159
      %p162 = scmp.ne.s32.totalorder %s147, %s161
      %p163 = scmp.eq.s32.totalorder %s26, 0
      %p164 = por %p162, %p163
      %s165 = ssub.s32 %s27, %s39
      %p166 = scmp.eq.s32.totalorder %s165, 0
      %s168 = sadd.s32 %s167, 1
      %s169 = scalar_select %p166, %s167, %s168
      %p172 = pneg %p166
      %p173 = scmp.eq.s32.totalorder %s20, 7
      %p174 = por %p172, %p173
      %p175 = scmp.ne.s32.totalorder %s167, %s170
      %p176 = scmp.eq.s32.totalorder %s20, 0
      %p177 = por %p175, %p176
      %p178 = scmp.ne.s32.totalorder %s167, %s170
      %p179 = scmp.eq.s32.totalorder %s25, 7
      %p180 = por %p178, %p179
      %p181 = scmp.ne.s32.totalorder %s170, %s171
      %p182 = scmp.eq.s32.totalorder %s25, 0
      %p183 = por %p181, %p182
      %p184 = scmp.ne.s32.totalorder %s170, %s171
      %p185 = scmp.eq.s32.totalorder %s26, 7
      %p186 = por %p184, %p185
      %p188 = scmp.ne.s32.totalorder %s171, %s187
      %p189 = scmp.eq.s32.totalorder %s26, 0
      %p190 = por %p188, %p189
      %p191 = scmp.le.s32.totalorder 1, %s20
      %p192 = scmp.lt.s32.totalorder %s20, 9
      %p193 = pnand %p191, %p192
      %p194 = pneg %p193
      // Predicated region
      $region9: #{tpu_custom_call.1} parent=5 // pred_check
        _
      $region10: #{tpu_custom_call.1} parent=5 // pred_check_branch
        %196 = sbr.rel (%p193) target = $region12
      $region11: #{tpu_custom_call.1} parent=5 // pred_region
        %s197 = ssub.s32 %s20, 1
        // Predicated region
        $region13: #{tpu_custom_call.1} parent=11 // pred_check
          %p198 = pneg %p157
        $region14: #{tpu_custom_call.1} parent=11 // pred_check_branch
          %200 = sbr.rel (%p198) target = $region16
        $region15: #{tpu_custom_call.1} parent=11 // pred_region
          _
        $region16: #{tpu_custom_call.1} parent=11 // pred_fallthru
          _
      $region12: #{tpu_custom_call.1} parent=5 // pred_fallthru
        _
      %p201 = scmp.lt.s32.totalorder %s20, 8
      // Predicated region
      $region17: #{tpu_custom_call.1} parent=5 // pred_check
        %p202 = pneg %p201
      $region18: #{tpu_custom_call.1} parent=5 // pred_check_branch
        %204 = sbr.rel (%p202) target = $region20
      $region19: #{tpu_custom_call.1} parent=5 // pred_region
        // Predicated region
        $region21: #{tpu_custom_call.1} parent=19 // pred_check
          %p205 = pneg %p52
        $region22: #{tpu_custom_call.1} parent=19 // pred_check_branch
          %207 = sbr.rel (%p205) target = $region24
        $region23: #{tpu_custom_call.1} parent=19 // pred_region
          %s208 = sand.u32 %s42, 1
          %s209 = scalar_lea.sflag [#allocation4], %s208
          %s210 = sand.u32 %s42, 1
          %s211 = smul.addr %s210, 8
          %s212 = scalar_lea.vmem [#allocation3], %s211
          %s214 = ssub.s32 128, 128
          %215 = vsyncadd %s209, %s214
          %s216 = smul.addr %s27, 128
          %s217 = scalar_lea.hbm %s0, %s216
          %s219 = sshll.u32 %s212, 4
          %s220 = int_to_ptr.vmem [resolvable:$true] %s219
          %222 = dma.hbm_to_vmem [thread:$0]  %s217, 128, %s220, %s209
        $region24: #{tpu_custom_call.1} parent=19 // pred_fallthru
          _
        // Predicated region
        $region25: #{tpu_custom_call.1} parent=19 // pred_check
          %p223 = pneg %p78
        $region26: #{tpu_custom_call.1} parent=19 // pred_check_branch
          %225 = sbr.rel (%p223) target = $region28
        $region27: #{tpu_custom_call.1} parent=19 // pred_region
          %s226 = sand.u32 %s20, 1
          %s227 = scalar_lea.sflag [#allocation7], %s226
          %s228 = sand.u32 %s68, 1
          %s229 = smul.addr %s228, 32
          %s230 = scalar_lea.vmem [#allocation6], %s229
          %s232 = ssub.s32 512, 512
          %233 = vsyncadd %s227, %s232
          %s234 = smul.addr %s28, 4
          %s235 = smul.addr %s234, 128
          %s236 = scalar_lea.hbm %s1, %s235
          %s237 = sshll.u32 %s230, 4
          %s238 = int_to_ptr.vmem [resolvable:$true] %s237
          %243 = dma.hbm_to_vmem [thread:$0]  %s236, 512, %s238, %s227, 128, 128, 8
        $region28: #{tpu_custom_call.1} parent=19 // pred_fallthru
          _
        // Predicated region
        $region29: #{tpu_custom_call.1} parent=19 // pred_check
          %p244 = pneg %p104
        $region30: #{tpu_custom_call.1} parent=19 // pred_check_branch
          %246 = sbr.rel (%p244) target = $region32
        $region31: #{tpu_custom_call.1} parent=19 // pred_region
          %p247 = scmp.lt.s32.totalorder %s28, 3
          %s248 = scalar_select %p247, %s28, 3
          %s249 = scalar_lea.vmem %s2, %s248
        $region32: #{tpu_custom_call.1} parent=19 // pred_fallthru
          _
        // Predicated region
        $region33: #{tpu_custom_call.1} parent=19 // pred_check
          %p250 = pneg %p130
        $region34: #{tpu_custom_call.1} parent=19 // pred_check_branch
          %252 = sbr.rel (%p250) target = $region36
        $region35: #{tpu_custom_call.1} parent=19 // pred_region
          %s253 = sand.u32 %s20, 1
          %s254 = scalar_lea.sflag [#allocation7], %s253
          %s255 = sand.u32 %s120, 1
          %s256 = smul.addr %s255, 32
          %s257 = scalar_lea.vmem [#allocation8], %s256
          %s259 = ssub.s32 512, 512
          %260 = vsyncadd %s254, %s259
          %s261 = smul.addr %s28, 4
          %s262 = smul.addr %s261, 128
          %s263 = scalar_lea.hbm %s3, %s262
          %s264 = sshll.u32 %s257, 4
          %s265 = int_to_ptr.vmem [resolvable:$true] %s264
          %270 = dma.hbm_to_vmem [thread:$0]  %s263, 512, %s265, %s254, 128, 128, 8
        $region36: #{tpu_custom_call.1} parent=19 // pred_fallthru
          _
      $region20: #{tpu_custom_call.1} parent=5 // pred_fallthru
        _
      %p271 = scmp.le.s32.totalorder 1, %s20
      %p272 = scmp.lt.s32.totalorder %s20, 9
      %p273 = pnand %p271, %p272
      %p274 = pneg %p273
      // Predicated region
      $region37: #{tpu_custom_call.1} parent=5 // pred_check
        _
      $region38: #{tpu_custom_call.1} parent=5 // pred_check_branch
        %276 = sbr.rel (%p273) target = $region40
      $region39: #{tpu_custom_call.1} parent=5 // pred_region
        %s277 = ssub.s32 %s20, 1
        %s278 = sand.u32 %s45, 1
        %s279 = scalar_lea.sflag [#allocation4], %s278
        %s280 = sand.u32 %s45, 1
        %s281 = smul.addr %s280, 8
        %s282 = scalar_lea.vmem [#allocation3], %s281
        // Predicated region
        $region41: #{tpu_custom_call.1} parent=39 // pred_check
          %p283 = pneg %p58
        $region42: #{tpu_custom_call.1} parent=39 // pred_check_branch
          %285 = sbr.rel (%p283) target = $region44
        $region43: #{tpu_custom_call.1} parent=39 // pred_region
          %286 = dma.done %s279, 128
        $region44: #{tpu_custom_call.1} parent=39 // pred_fallthru
          _
        %s287 = sand.u32 %s25, 1
        %s288 = scalar_lea.sflag [#allocation7], %s287
        %s289 = sand.u32 %s71, 1
        %s290 = smul.addr %s289, 32
        %s291 = scalar_lea.vmem [#allocation6], %s290
        // Predicated region
        $region45: #{tpu_custom_call.1} parent=39 // pred_check
          %p292 = pneg %p84
        $region46: #{tpu_custom_call.1} parent=39 // pred_check_branch
          %294 = sbr.rel (%p292) target = $region48
        $region47: #{tpu_custom_call.1} parent=39 // pred_region
          %295 = dma.done %s288, 512
        $region48: #{tpu_custom_call.1} parent=39 // pred_fallthru
          _
        %s296 = sand.u32 %s25, 1
        %s297 = scalar_lea.sflag [#allocation7], %s296
        %s298 = sand.u32 %s123, 1
        %s299 = smul.addr %s298, 32
        %s300 = scalar_lea.vmem [#allocation8], %s299
        // Predicated region
        $region49: #{tpu_custom_call.1} parent=39 // pred_check
          %p301 = pneg %p136
        $region50: #{tpu_custom_call.1} parent=39 // pred_check_branch
          %303 = sbr.rel (%p301) target = $region52
        $region51: #{tpu_custom_call.1} parent=39 // pred_region
          %304 = dma.done %s297, 512
        $region52: #{tpu_custom_call.1} parent=39 // pred_fallthru
          _
        %s305 = sand.u32 %s45, 1
        %s306 = scalar_lea.sflag [#allocation4], %s305
        %s307 = sand.u32 %s45, 1
        %s308 = smul.addr %s307, 8
        %s309 = scalar_lea.vmem [#allocation3], %s308
        %p310 = pneg %p58
        %p311 = pneg %p55
        %s312 = sand.u32 %s25, 1
        %s313 = scalar_lea.sflag [#allocation7], %s312
        %s314 = sand.u32 %s71, 1
        %s315 = smul.addr %s314, 32
        %s316 = scalar_lea.vmem [#allocation6], %s315
        %p317 = pneg %p84
        %p318 = pneg %p81
        %p319 = scmp.lt.s32.totalorder %s30, 3
        %s320 = scalar_select %p319, %s30, 3
        %s321 = scalar_lea.vmem %s2, %s320
        %p322 = pneg %p110
        %p323 = pneg %p107
        %s324 = sand.u32 %s25, 1
        %s325 = scalar_lea.sflag [#allocation7], %s324
        %s326 = sand.u32 %s123, 1
        %s327 = smul.addr %s326, 32
        %s328 = scalar_lea.vmem [#allocation8], %s327
        %p329 = pneg %p136
        %p330 = pneg %p133
        %p331 = pneg %p157
        %p332 = pneg %p154
        %p333 = pneg %p183
        %p334 = pneg %p180
        %s335 = sand.u32 %s170, 1
        %s336 = scalar_lea.sflag [#allocation5], %s335
        %s337 = sand.u32 %s170, 1
        %s338 = smul.addr %s337, 8
        %s339 = scalar_lea.vmem [#allocation9], %s338
        %p340 = scmp.lt.s32.totalorder %s30, 3
        %s341 = scalar_select %p340, %s30, 3
        %s342 = scalar_lea.vmem %s2, %s341
        %p343 = scmp.eq.s32.totalorder %s30, 0
        // Predicated region
        $region53: #{tpu_custom_call.1} parent=39 // pred_check
          %p344 = pneg %p343
        $region54: #{tpu_custom_call.1} parent=39 // pred_check_branch
          %346 = sbr.rel (%p344) target = $region56
        $region55: #{tpu_custom_call.1} parent=39 // pred_region
          %vm347 = vcmask 261120
          %348 = vst.msk [vmem:[#allocation2] sm:$0xff] %vm347, 0.0
        $region56: #{tpu_custom_call.1} parent=39 // pred_fallthru
          _
        %v349 = vld [vmem:[%s282] sm:$0xff]
        %v350 = vld [vmem:[%s291] sm:$0xff]
        %v351 = vld [vmem:[%s291 + $0x8] sm:$0xff]
        %v352 = vld [vmem:[%s291 + $0x10] sm:$0xff]
        %v353 = vld [vmem:[%s291 + $0x18] sm:$0xff]
        %v354 = vld [vmem:[%s342] sm:$0x1]
        %v356 = vlaneseq
        %v357 = vshrl.u32 %v356, 7
        %v358 = vsub.s32 0, %v357
        %v359 = vrot.slane %v354, %v358
        %vm361 = vcmask 261120
        %v363 = vsel %vm361, %v349, 0
        %365 = vmatprep.subr.mxu0 0.0
        %366 = vmatpush1.msra.mxu0 %v350
        %367 = vmatprep.subr.mxu0 0.0
        %368 = vmatpush1.msra.mxu0 %v351
        %369 = vmatprep.subr.mxu0 0.0
        %370 = vmatpush1.msra.mxu0 %v352
        %371 = vmatprep.subr.mxu0 0.0
        %372 = vmatpush1.msra.mxu0 %v353
        %373 = vmatprep.subr.mxu0 0.0
        %374 = vmatpush1.msra.mxu0 0.0
        %375 = vmatprep.subr.mxu0 0.0
        %376 = vmatpush1.msra.mxu0 0.0
        %377 = vmatprep.subr.mxu0 0.0
        %378 = vmatpush1.msra.mxu0 0.0
        %379 = vmatprep.subr.mxu0 0.0
        %380 = vmatpush1.msra.mxu0 0.0
        %381 = vmatprep.subr.mxu0 0.0
        %382 = vmatpush1.msra.mxu0 0.0
        %383 = vmatprep.subr.mxu0 0.0
        %384 = vmatpush1.msra.mxu0 0.0
        %385 = vmatprep.subr.mxu0 0.0
        %386 = vmatpush1.msra.mxu0 0.0
        %387 = vmatprep.subr.mxu0 0.0
        %388 = vmatpush1.msra.mxu0 0.0
        %389 = vmatprep.subr.mxu0 0.0
        %390 = vmatpush1.msra.mxu0 0.0
        %391 = vmatprep.subr.mxu0 0.0
        %392 = vmatpush1.msra.mxu0 0.0
        %393 = vmatprep.subr.mxu0 0.0
        %394 = vmatpush1.msra.mxu0 0.0
        %395 = vmatprep.subr.mxu0 0.0
        %396 = vmatpush1.msra.mxu0 0.0
        %397 = vmatprep.subr.mxu0 0.0
        %398 = vmatpush1.msra.mxu0 0.0
        %399 = vmatprep.subr.mxu0 0.0
        %400 = vmatpush1.msra.mxu0 0.0
        %401 = vmatprep.subr.mxu0 0.0
        %402 = vmatpush1.msra.mxu0 0.0
        %403 = vmatprep.subr.mxu0 0.0
        %404 = vmatpush1.msra.mxu0 0.0
        %405 = vmatprep.subr.mxu0 0.0
        %406 = vmatpush1.msra.mxu0 0.0
        %407 = vmatprep.subr.mxu0 0.0
        %408 = vmatpush1.msra.mxu0 0.0
        %409 = vmatprep.subr.mxu0 0.0
        %410 = vmatpush1.msra.mxu0 0.0
        %411 = vmatprep.subr.mxu0 0.0
        %412 = vmatpush1.msra.mxu0 0.0
        %413 = vmatprep.subr.mxu0 0.0
        %414 = vmatpush1.msra.mxu0 0.0
        %415 = vmatprep.subr.mxu0 0.0
        %416 = vmatpush1.msra.mxu0 0.0
        %417 = vmatprep.subr.mxu0 0.0
        %418 = vmatpush1.msra.mxu0 0.0
        %419 = vmatprep.subr.mxu0 0.0
        %420 = vmatpush1.msra.mxu0 0.0
        %421 = vmatprep.subr.mxu0 0.0
        %422 = vmatpush1.msra.mxu0 0.0
        %423 = vmatprep.subr.mxu0 0.0
        %424 = vmatpush1.msra.mxu0 0.0
        %425 = vmatprep.subr.mxu0 0.0
        %426 = vmatpush1.msra.mxu0 0.0
        %427 = vmatprep.subr.mxu0 0.0
        %428 = vmatpush1.msra.mxu0 0.0
        %429 = vmatprep.mubr.f32.mxu0 0.0
        %430 = vmatmul.mubr.f32.gmra.mrb[0].mxu0 %v363
        %v431 = vpop.f32.mrb[0].mxu0
        %v432 = vadd.f32 %v359, %v431
        %v433 = vpop.f32.mrb[0].mxu0
        %434 = vdwg.mxu0
        %v435 = vmul.f32 %v432, 2.828427
        %437 = vrot.lane.b32.xlu0 %v432, 96
        %v438 = vpop.permute.xlu0 %437
        %v440 = vsel %vm361, %v435, 0
        %v442 = vsel %vm361, %v438, 0
        %444 = vmatprep.subr.mxu0 0.0
        %445 = vmatpush1.xpose.msra.mxu0 %v442
        %446 = vmatprep.subr.mxu0 0.0
        %447 = vmatpush1.xpose.msra.mxu0 0.0
        %448 = vmatprep.subr.mxu0 0.0
        %449 = vmatpush1.xpose.msra.mxu0 0.0
        %450 = vmatprep.subr.mxu0 0.0
        %451 = vmatpush1.xpose.msra.mxu0 0.0
        %452 = vmatprep.subr.mxu0 0.0
        %453 = vmatpush1.xpose.msra.mxu0 0.0
        %454 = vmatprep.subr.mxu0 0.0
        %455 = vmatpush1.xpose.msra.mxu0 0.0
        %456 = vmatprep.subr.mxu0 0.0
        %457 = vmatpush1.xpose.msra.mxu0 0.0
        %458 = vmatprep.subr.mxu0 0.0
        %459 = vmatpush1.xpose.msra.mxu0 0.0
        %460 = vmatprep.subr.mxu0 0.0
        %461 = vmatpush1.xpose.msra.mxu0 0.0
        %462 = vmatprep.subr.mxu0 0.0
        %463 = vmatpush1.xpose.msra.mxu0 0.0
        %464 = vmatprep.subr.mxu0 0.0
        %465 = vmatpush1.xpose.msra.mxu0 0.0
        %466 = vmatprep.subr.mxu0 0.0
        %467 = vmatpush1.xpose.msra.mxu0 0.0
        %468 = vmatprep.subr.mxu0 0.0
        %469 = vmatpush1.xpose.msra.mxu0 0.0
        %470 = vmatprep.subr.mxu0 0.0
        %471 = vmatpush1.xpose.msra.mxu0 0.0
        %472 = vmatprep.subr.mxu0 0.0
        %473 = vmatpush1.xpose.msra.mxu0 0.0
        %474 = vmatprep.subr.mxu0 0.0
        %475 = vmatpush1.xpose.msra.mxu0 0.0
        %476 = vmatprep.subr.mxu0 0.0
        %477 = vmatpush1.xpose.msra.mxu0 0.0
        %478 = vmatprep.subr.mxu0 0.0
        %479 = vmatpush1.xpose.msra.mxu0 0.0
        %480 = vmatprep.subr.mxu0 0.0
        %481 = vmatpush1.xpose.msra.mxu0 0.0
        %482 = vmatprep.subr.mxu0 0.0
        %483 = vmatpush1.xpose.msra.mxu0 0.0
        %484 = vmatprep.subr.mxu0 0.0
        %485 = vmatpush1.xpose.msra.mxu0 0.0
        %486 = vmatprep.subr.mxu0 0.0
        %487 = vmatpush1.xpose.msra.mxu0 0.0
        %488 = vmatprep.subr.mxu0 0.0
        %489 = vmatpush1.xpose.msra.mxu0 0.0
        %490 = vmatprep.subr.mxu0 0.0
        %491 = vmatpush1.xpose.msra.mxu0 0.0
        %492 = vmatprep.subr.mxu0 0.0
        %493 = vmatpush1.xpose.msra.mxu0 0.0
        %494 = vmatprep.subr.mxu0 0.0
        %495 = vmatpush1.xpose.msra.mxu0 0.0
        %496 = vmatprep.subr.mxu0 0.0
        %497 = vmatpush1.xpose.msra.mxu0 0.0
        %498 = vmatprep.subr.mxu0 0.0
        %499 = vmatpush1.xpose.msra.mxu0 0.0
        %500 = vmatprep.subr.mxu0 0.0
        %501 = vmatpush1.xpose.msra.mxu0 0.0
        %502 = vmatprep.subr.mxu0 0.0
        %503 = vmatpush1.xpose.msra.mxu0 0.0
        %504 = vmatprep.subr.mxu0 0.0
        %505 = vmatpush1.xpose.msra.mxu0 0.0
        %506 = vmatprep.subr.mxu0 0.0
        %507 = vmatpush1.xpose.msra.mxu0 0.0
        %508 = vmatprep.mubr.f32.mxu0 0.0
        %509 = vmatmul.mubr.f32.gmra.mrb[0].mxu0 %v440
        %v510 = vpop.f32.mrb[0].mxu0
        %v511 = vadd.f32 0.0, %v510
        %v512 = vpop.f32.mrb[0].mxu0
        %513 = vdwg.mxu0
        %vm514 = vcmask 64512
        %v515 = vsel %vm514, %v511, -inf
        %516 = vmax.xlane.f32.xlu0 %v515
        %v517 = vpop.xlane.xlu0 %516
        %v518 = vsub.f32 %v511, %v517
        %v519 = vmul.f32 %v518, 1.442695
        %v520 = vpow.pop %v519
        %v521 = vsel %vm514, %v520, 0.0
        %522 = vadd.xlane.f32.xlu0 %v521
        %v523 = vpop.xlane.xlu0 %522
        %v524 = vrcp.pop %v523
        %v525 = vmul.f32 %v520, %v524
        %526 = vrot.lane.b32.xlu0 %v432, 64
        %v527 = vpop.permute.xlu0 %526
        %v530 = vsel %vm514, %v525, 0
        %532 = vmatprep.subr.mxu0 0.0
        %533 = vmatpush1.msra.mxu0 %v527
        %534 = vmatprep.subr.mxu0 0.0
        %535 = vmatpush1.msra.mxu0 0.0
        %536 = vmatprep.subr.mxu0 0.0
        %537 = vmatpush1.msra.mxu0 0.0
        %538 = vmatprep.subr.mxu0 0.0
        %539 = vmatpush1.msra.mxu0 0.0
        %540 = vmatprep.subr.mxu0 0.0
        %541 = vmatpush1.msra.mxu0 0.0
        %542 = vmatprep.subr.mxu0 0.0
        %543 = vmatpush1.msra.mxu0 0.0
        %544 = vmatprep.subr.mxu0 0.0
        %545 = vmatpush1.msra.mxu0 0.0
        %546 = vmatprep.subr.mxu0 0.0
        %547 = vmatpush1.msra.mxu0 0.0
        %548 = vmatprep.subr.mxu0 0.0
        %549 = vmatpush1.msra.mxu0 0.0
        %550 = vmatprep.subr.mxu0 0.0
        %551 = vmatpush1.msra.mxu0 0.0
        %552 = vmatprep.subr.mxu0 0.0
        %553 = vmatpush1.msra.mxu0 0.0
        %554 = vmatprep.subr.mxu0 0.0
        %555 = vmatpush1.msra.mxu0 0.0
        %556 = vmatprep.subr.mxu0 0.0
        %557 = vmatpush1.msra.mxu0 0.0
        %558 = vmatprep.subr.mxu0 0.0
        %559 = vmatpush1.msra.mxu0 0.0
        %560 = vmatprep.subr.mxu0 0.0
        %561 = vmatpush1.msra.mxu0 0.0
        %562 = vmatprep.subr.mxu0 0.0
        %563 = vmatpush1.msra.mxu0 0.0
        %564 = vmatprep.subr.mxu0 0.0
        %565 = vmatpush1.msra.mxu0 0.0
        %566 = vmatprep.subr.mxu0 0.0
        %567 = vmatpush1.msra.mxu0 0.0
        %568 = vmatprep.subr.mxu0 0.0
        %569 = vmatpush1.msra.mxu0 0.0
        %570 = vmatprep.subr.mxu0 0.0
        %571 = vmatpush1.msra.mxu0 0.0
        %572 = vmatprep.subr.mxu0 0.0
        %573 = vmatpush1.msra.mxu0 0.0
        %574 = vmatprep.subr.mxu0 0.0
        %575 = vmatpush1.msra.mxu0 0.0
        %576 = vmatprep.subr.mxu0 0.0
        %577 = vmatpush1.msra.mxu0 0.0
        %578 = vmatprep.subr.mxu0 0.0
        %579 = vmatpush1.msra.mxu0 0.0
        %580 = vmatprep.subr.mxu0 0.0
        %581 = vmatpush1.msra.mxu0 0.0
        %582 = vmatprep.subr.mxu0 0.0
        %583 = vmatpush1.msra.mxu0 0.0
        %584 = vmatprep.subr.mxu0 0.0
        %585 = vmatpush1.msra.mxu0 0.0
        %586 = vmatprep.subr.mxu0 0.0
        %587 = vmatpush1.msra.mxu0 0.0
        %588 = vmatprep.subr.mxu0 0.0
        %589 = vmatpush1.msra.mxu0 0.0
        %590 = vmatprep.subr.mxu0 0.0
        %591 = vmatpush1.msra.mxu0 0.0
        %592 = vmatprep.subr.mxu0 0.0
        %593 = vmatpush1.msra.mxu0 0.0
        %594 = vmatprep.subr.mxu0 0.0
        %595 = vmatpush1.msra.mxu0 0.0
        %596 = vmatprep.mubr.f32.mxu0 0.0
        %597 = vmatmul.mubr.f32.gmra.mrb[0].mxu0 %v530
        %v598 = vpop.f32.mrb[0].mxu0
        %v599 = vadd.f32 0.0, %v598
        %v600 = vpop.f32.mrb[0].mxu0
        %601 = vdwg.mxu0
        %v602 = vld [vmem:[#allocation2] sm:$0xff]
        %v603 = vld [vmem:[%s300] sm:$0xff]
        %v604 = vld [vmem:[%s300 + $0x8] sm:$0xff]
        %v605 = vld [vmem:[%s300 + $0x10] sm:$0xff]
        %v606 = vld [vmem:[%s300 + $0x18] sm:$0xff]
        %v608 = vsel %vm361, %v599, 0
        %610 = vmatprep.subr.mxu0 0.0
        %611 = vmatpush1.msra.mxu0 %v603
        %612 = vmatprep.subr.mxu0 0.0
        %613 = vmatpush1.msra.mxu0 %v604
        %614 = vmatprep.subr.mxu0 0.0
        %615 = vmatpush1.msra.mxu0 %v605
        %616 = vmatprep.subr.mxu0 0.0
        %617 = vmatpush1.msra.mxu0 %v606
        %618 = vmatprep.subr.mxu0 0.0
        %619 = vmatpush1.msra.mxu0 0.0
        %620 = vmatprep.subr.mxu0 0.0
        %621 = vmatpush1.msra.mxu0 0.0
        %622 = vmatprep.subr.mxu0 0.0
        %623 = vmatpush1.msra.mxu0 0.0
        %624 = vmatprep.subr.mxu0 0.0
        %625 = vmatpush1.msra.mxu0 0.0
        %626 = vmatprep.subr.mxu0 0.0
        %627 = vmatpush1.msra.mxu0 0.0
        %628 = vmatprep.subr.mxu0 0.0
        %629 = vmatpush1.msra.mxu0 0.0
        %630 = vmatprep.subr.mxu0 0.0
        %631 = vmatpush1.msra.mxu0 0.0
        %632 = vmatprep.subr.mxu0 0.0
        %633 = vmatpush1.msra.mxu0 0.0
        %634 = vmatprep.subr.mxu0 0.0
        %635 = vmatpush1.msra.mxu0 0.0
        %636 = vmatprep.subr.mxu0 0.0
        %637 = vmatpush1.msra.mxu0 0.0
        %638 = vmatprep.subr.mxu0 0.0
        %639 = vmatpush1.msra.mxu0 0.0
        %640 = vmatprep.subr.mxu0 0.0
        %641 = vmatpush1.msra.mxu0 0.0
        %642 = vmatprep.subr.mxu0 0.0
        %643 = vmatpush1.msra.mxu0 0.0
        %644 = vmatprep.subr.mxu0 0.0
        %645 = vmatpush1.msra.mxu0 0.0
        %646 = vmatprep.subr.mxu0 0.0
        %647 = vmatpush1.msra.mxu0 0.0
        %648 = vmatprep.subr.mxu0 0.0
        %649 = vmatpush1.msra.mxu0 0.0
        %650 = vmatprep.subr.mxu0 0.0
        %651 = vmatpush1.msra.mxu0 0.0
        %652 = vmatprep.subr.mxu0 0.0
        %653 = vmatpush1.msra.mxu0 0.0
        %654 = vmatprep.subr.mxu0 0.0
        %655 = vmatpush1.msra.mxu0 0.0
        %656 = vmatprep.subr.mxu0 0.0
        %657 = vmatpush1.msra.mxu0 0.0
        %658 = vmatprep.subr.mxu0 0.0
        %659 = vmatpush1.msra.mxu0 0.0
        %660 = vmatprep.subr.mxu0 0.0
        %661 = vmatpush1.msra.mxu0 0.0
        %662 = vmatprep.subr.mxu0 0.0
        %663 = vmatpush1.msra.mxu0 0.0
        %664 = vmatprep.subr.mxu0 0.0
        %665 = vmatpush1.msra.mxu0 0.0
        %666 = vmatprep.subr.mxu0 0.0
        %667 = vmatpush1.msra.mxu0 0.0
        %668 = vmatprep.subr.mxu0 0.0
        %669 = vmatpush1.msra.mxu0 0.0
        %670 = vmatprep.subr.mxu0 0.0
        %671 = vmatpush1.msra.mxu0 0.0
        %672 = vmatprep.subr.mxu0 0.0
        %673 = vmatpush1.msra.mxu0 0.0
        %674 = vmatprep.mubr.f32.mxu0 0.0
        %675 = vmatmul.mubr.f32.gmra.mrb[0].mxu0 %v608
        %v676 = vpop.f32.mrb[0].mxu0
        %v677 = vadd.f32 0.0, %v676
        %v678 = vpop.f32.mrb[0].mxu0
        %679 = vdwg.mxu0
        %v680 = vadd.f32 %v602, %v677
        %681 = vst.msk [vmem:[#allocation2] sm:$0xff] %vm361, %v680
        %p682 = scmp.eq.s32.totalorder %s30, 3
        // Predicated region
        $region57: #{tpu_custom_call.1} parent=39 // pred_check
          %p683 = pneg %p682
        $region58: #{tpu_custom_call.1} parent=39 // pred_check_branch
          %685 = sbr.rel (%p683) target = $region60
        $region59: #{tpu_custom_call.1} parent=39 // pred_region
          %v686 = vld [vmem:[#allocation2] sm:$0xff]
          %v687 = vld [vmem:[%s4] sm:$0x1]
          %v689 = vlaneseq
          %v690 = vshrl.u32 %v689, 7
          %v691 = vsub.s32 0, %v690
          %v692 = vrot.slane %v687, %v691
          %v694 = vadd.f32 %v686, %v692
          %695 = vst.msk [vmem:[%s339] sm:$0xff] %vm361, %v694
        $region60: #{tpu_custom_call.1} parent=39 // pred_fallthru
          _
        %s696 = sand.u32 %s170, 1
        %s697 = scalar_lea.sflag [#allocation5], %s696
        %s698 = sand.u32 %s170, 1
        %s699 = smul.addr %s698, 8
        %s700 = scalar_lea.vmem [#allocation9], %s699
        // Predicated region
        $region61: #{tpu_custom_call.1} parent=39 // pred_check
          %p701 = pneg %p180
        $region62: #{tpu_custom_call.1} parent=39 // pred_check_branch
          %703 = sbr.rel (%p701) target = $region64
        $region63: #{tpu_custom_call.1} parent=39 // pred_region
          %s705 = ssub.s32 128, 128
          %706 = vsyncadd %s697, %s705
          %s707 = smul.addr %s29, 128
          %s708 = scalar_lea.hbm %s5, %s707
          %s710 = sshll.u32 %s700, 4
          %s711 = int_to_ptr.vmem [resolvable:$true] %s710
          %713 = dma.vmem_to_hbm [thread:$0]  %s711, 128, %s708, %s697
        $region64: #{tpu_custom_call.1} parent=39 // pred_fallthru
          _
      $region40: #{tpu_custom_call.1} parent=5 // pred_fallthru
        _
      %p714 = scmp.le.s32.totalorder 2, %s20
      // Predicated region
      $region65: #{tpu_custom_call.1} parent=5 // pred_check
        %p715 = pneg %p714
      $region66: #{tpu_custom_call.1} parent=5 // pred_check_branch
        %717 = sbr.rel (%p715) target = $region68
      $region67: #{tpu_custom_call.1} parent=5 // pred_region
        %s718 = ssub.s32 %s20, 2
        // Predicated region
        $region69: #{tpu_custom_call.1} parent=67 // pred_check
          %p719 = pneg %p186
        $region70: #{tpu_custom_call.1} parent=67 // pred_check_branch
          %721 = sbr.rel (%p719) target = $region72
        $region71: #{tpu_custom_call.1} parent=67 // pred_region
          %s722 = sand.u32 %s171, 1
          %s723 = scalar_lea.sflag [#allocation5], %s722
          %s724 = sand.u32 %s171, 1
          %s725 = smul.addr %s724, 8
          %s726 = scalar_lea.vmem [#allocation9], %s725
          %727 = dma.done %s723, 128
        $region72: #{tpu_custom_call.1} parent=67 // pred_fallthru
          _
      $region68: #{tpu_custom_call.1} parent=5 // pred_fallthru
        _
    $region6: #{tpu_custom_call.1} parent=1 // loop_footer
      %s24 = sadd.s32 1, %s20
    $region7: #{tpu_custom_call.1} parent=1 // loop_footer_branch
      %19 = sbr.rel target = $region3
    $region8: #{tpu_custom_call.1} parent=1 // loop_exit
      _
    %728 = vsyncpa [#allocation4], 1
    %s729 = scalar_lea.sflag [#allocation4], 1
    %730 = vsyncpa %s729, 1
    %731 = vsyncpa [#allocation7], 1
    %s732 = scalar_lea.sflag [#allocation7], 1
    %733 = vsyncpa %s732, 1
    %734 = vsyncpa [#allocation5], 1
    %s735 = scalar_lea.sflag [#allocation5], 1
    %736 = vsyncpa %s735, 1

</llo_original>
